<compile_context>
chip_gen: v7x
topology: tpu7x:2x2x1
jax: 0.10.0
libtpu: 0.0.40
codegen_flags: <defaults>
</compile_context>

<pallas_src>
import functools

import jax
import jax.numpy as jnp
from jax import lax
from jax.experimental import pallas as pl
from jax.experimental.pallas import tpu as pltpu

_MIB = 1024 * 1024


def _device_budget():
    """(max bytes per input block, scoped-VMEM limit) tuned per TPU generation."""
    try:
        vmem_cap = pltpu.get_tpu_info().vmem_capacity_bytes
    except Exception:  # API drift / not queryable: assume v7x-sized (64 MiB) VMEM
        vmem_cap = 64 * _MIB
    if vmem_cap <= 64 * _MIB:          # v7x: 64 MiB VMEM per TensorCore
        return 4 * _MIB, 48 * _MIB
    return 8 * _MIB, 64 * _MIB         # v5e / v6e: 128 MiB physical VMEM


def _edge_sum_kernel(x1_ref, x2_ref, p1_ref, p2_ref, acc1_ref, acc2_ref, *,
                     w, valid, nc, tb, g_serial, n_groups, group_rows,
                     needs_mask):
    pi = pl.program_id(0)              # "parallel" axis (megacore on v7x)
    j = pl.program_id(1)               # "arbitrary" reduction axis (innermost)

    @pl.when(j == 0)
    def _init():
        acc1_ref[...] = jnp.zeros_like(acc1_ref)
        acc2_ref[...] = jnp.zeros_like(acc2_ref)

    # Global plane index of row 0 of this (possibly ragged / overhang) block.
    first_plane = (pi * g_serial + j) * tb
    if needs_mask:
        sub = lax.broadcasted_iota(jnp.int32, (group_rows, 1), 0)  # hoisted

    def group_body(gi, carry):
        base = gi * group_rows
        if not isinstance(base, int):
            base = pl.multiple_of(base, group_rows)
        g1 = x1_ref[pl.ds(base, group_rows), :]
        g2 = x2_ref[pl.ds(base, group_rows), :]
        # Vertical neighbour of flat index i (within a plane) is i + W.
        d1 = jnp.abs(g1[:, :valid] - g1[:, w:]).astype(jnp.float32)
        d2 = jnp.abs(g2[:, :valid] - g2[:, w:]).astype(jnp.float32)
        if needs_mask:
            row_ok = (first_plane + base + sub) < nc       # (group_rows, 1)
            d1 = jnp.where(row_ok, d1, 0.0)
            d2 = jnp.where(row_ok, d2, 0.0)
        acc1_ref[...] += d1
        acc2_ref[...] += d2
        return carry

    if n_groups == 1:
        group_body(0, 0)
    else:
        lax.fori_loop(0, n_groups, group_body, 0,
                      unroll=True if n_groups <= 8 else 4)

    @pl.when(j == pl.num_programs(1) - 1)
    def _finalize():
        s1 = jnp.sum(acc1_ref[...])
        s2 = jnp.sum(acc2_ref[...])
        # write a lane-dense (1, 8, 128) slab filled with this core's total
        p1_ref[...] = jnp.zeros_like(p1_ref) + s1
        p2_ref[...] = jnp.zeros_like(p2_ref) + s2


def _pick_tiling(nc, hw, itemsize, max_block_bytes):
    """Choose (P, TB, G, n_blocks): P parallel chunks x G serial steps of TB planes."""
    plane_bytes = hw * itemsize
    tb = max(1, max_block_bytes // plane_bytes)
    if tb >= nc:
        tb = nc                                   # one block covers all planes
    else:
        tb = max(8, (tb // 8) * 8)                # (8,128) rule: sublane dim % 8
        tb = tb if tb < nc else nc
    n_blocks = -(-nc // tb)
    p = 2 if n_blocks >= 2 else 1   # both v7x TensorCores; harmless on 1-TC chips
    g = -(-n_blocks // p)
    return p, tb, g, n_blocks


def _edge_sums(x1_nchw, x2_nchw, *, max_block_bytes=None, vmem_limit_bytes=None):
    assert x1_nchw.shape == x2_nchw.shape, "X1 and X2 must have the same shape"
    n, c, h, w = x1_nchw.shape
    if h < 2:
        # PyTorch would hit int(0)/int(0) -> ZeroDivisionError here anyway.
        raise ValueError("edgeV_loss needs H >= 2")
    nc, hw = n * c, h * w
    valid = hw - w                                # vertical pairs per plane

    auto_block, auto_limit = _device_budget()
    max_block_bytes = auto_block if max_block_bytes is None else max_block_bytes
    vmem_limit_bytes = auto_limit if vmem_limit_bytes is None else vmem_limit_bytes

    itemsize = max(jnp.dtype(x1_nchw.dtype).itemsize,
                   jnp.dtype(x2_nchw.dtype).itemsize)
    p, tb, g, n_blocks = _pick_tiling(nc, hw, itemsize, max_block_bytes)
    group_rows = 8 if (tb >= 8 and tb % 8 == 0) else tb
    n_groups = tb // group_rows
    needs_mask = (p * g * tb != nc)               # ragged last block / overhang

    # Lane-dense 2-D view (planes, H*W); contiguous reshape, no dtype cast.
    x1 = x1_nchw.reshape(nc, hw)
    x2 = x2_nchw.reshape(nc, hw)

    if p * g == n_blocks:
        in_block = pl.BlockSpec((tb, hw), lambda pi, j: (pi * g + j, 0))
    else:
        # Overhang steps re-read the last in-bounds block; fully masked in-kernel.
        in_block = pl.BlockSpec(
            (tb, hw), lambda pi, j: (jnp.minimum(pi * g + j, n_blocks - 1), 0))
    out_block = pl.BlockSpec((1, 8, 128), lambda pi, j: (pi, 0, 0))

    kernel = functools.partial(
        _edge_sum_kernel, w=w, valid=valid, nc=nc, tb=tb, g_serial=g,
        n_groups=n_groups, group_rows=group_rows, needs_mask=needs_mask)

    cost = pl.CostEstimate(
        flops=6 * nc * (h - 1) * w,               # sub+abs+add for two tensors
        transcendentals=0,
        bytes_accessed=2 * nc * hw * itemsize + 2 * p * 8 * 128 * 4)

    p1, p2 = pl.pallas_call(
        kernel,
        out_shape=(jax.ShapeDtypeStruct((p, 8, 128), jnp.float32),
                   jax.ShapeDtypeStruct((p, 8, 128), jnp.float32)),
        grid_spec=pltpu.PrefetchScalarGridSpec(
            num_scalar_prefetch=0,
            grid=(p, g),
            in_specs=[in_block, in_block],
            out_specs=[out_block, out_block],
            scratch_shapes=[pltpu.VMEM((group_rows, valid), jnp.float32),
                            pltpu.VMEM((group_rows, valid), jnp.float32)],
        ),
        compiler_params=pltpu.CompilerParams(
            dimension_semantics=("parallel", "arbitrary"),
            vmem_limit_bytes=vmem_limit_bytes,
        ),
        cost_estimate=cost,
    )(x1, x2)

    # tiny cross-core reduction of the per-core partial sums
    return jnp.sum(p1[:, 0, 0]), jnp.sum(p2[:, 0, 0])


def edgeV_loss(X1, X2):
    """Pallas equivalent of the PyTorch edgeV_loss forward (float32 scalar)."""
    s1, s2 = _edge_sums(X1, X2)
    # PyTorch int() truncates toward zero; the sums are non-negative.
    return -jnp.log(jnp.trunc(s1) / jnp.trunc(s2))


# ----------------------------------------------------------------------------
# self-test
# ----------------------------------------------------------------------------
def _ref_sums(X1, X2):
    d1 = jnp.abs(X1[:, :, :-1, :] - X1[:, :, 1:, :]).astype(jnp.float32)
    d2 = jnp.abs(X2[:, :, :-1, :] - X2[:, :, 1:, :]).astype(jnp.float32)
    return jnp.sum(d1), jnp.sum(d2)


def _check(X1, X2, **kw):
    s1, s2 = _edge_sums(X1, X2, **kw)
    jax.block_until_ready((s1, s2))
    r1, r2 = _ref_sums(X1, X2)
    assert jnp.allclose(s1, r1, rtol=1e-5, atol=1e-2), (s1, r1, kw)
    assert jnp.allclose(s2, r2, rtol=1e-5, atol=1e-2), (s2, r2, kw)


if __name__ == "__main__":
    key = jax.random.PRNGKey(0)
    keys = jax.random.split(key, 12)

    # Main case: typical small NCHW input for the module.
    X1 = jax.random.uniform(keys[0], (2, 4, 16, 16), dtype=jnp.float32)
    X2 = jax.random.uniform(keys[1], (2, 4, 16, 16), dtype=jnp.float32)

    out = edgeV_loss(X1, X2)
    jax.block_until_ready(out)

    r1, r2 = _ref_sums(X1, X2)
    ref_loss = -jnp.log(jnp.trunc(r1) / jnp.trunc(r2))
    _check(X1, X2)
    # loose tolerance: trunc() near an integer boundary may legally flip by 1
    assert jnp.allclose(out, ref_loss, rtol=1e-3, atol=5e-3), (out, ref_loss)

    # Ragged last block; both steps of the parallel axis active.
    A1 = jax.random.uniform(keys[2], (3, 5, 16, 16), dtype=jnp.float32)
    A2 = jax.random.uniform(keys[3], (3, 5, 16, 16), dtype=jnp.float32)
    _check(A1, A2, max_block_bytes=1024)

    # Odd block count -> overhang step on the parallel axis (clamped index_map).
    B1 = jax.random.uniform(keys[4], (1, 17, 16, 16), dtype=jnp.float32)
    B2 = jax.random.uniform(keys[5], (1, 17, 16, 16), dtype=jnp.float32)
    _check(B1, B2, max_block_bytes=1024)

    # Single block whose plane count is not a multiple of 8.
    C1 = jax.random.uniform(keys[6], (1, 5, 16, 16), dtype=jnp.float32)
    C2 = jax.random.uniform(keys[7], (1, 5, 16, 16), dtype=jnp.float32)
    _check(C1, C2)

    # Multiple 8-row groups per block (in-kernel group loop), no masking.
    D1 = jax.random.uniform(keys[8], (2, 16, 16, 16), dtype=jnp.float32)
    D2 = jax.random.uniform(keys[9], (2, 16, 16, 16), dtype=jnp.float32)
    _check(D1, D2, max_block_bytes=16 * 1024)

    # bf16 streaming path (native-dtype sub/abs, f32 accumulate).
    E1 = jax.random.uniform(keys[10], (2, 4, 16, 16)).astype(jnp.bfloat16)
    E2 = jax.random.uniform(keys[11], (2, 4, 16, 16)).astype(jnp.bfloat16)
    _check(E1, E2)

    print("KERNEL_OK")
</pallas_src>

<mosaic_0001>
module attributes {stable_mosaic.version = 11 : i64} {
  func.func @_edge_sum_kernel(%arg0: i32, %arg1: i32, %arg2: memref<8x256xf32, #tpu.memory_space<vmem>>, %arg3: memref<8x256xf32, #tpu.memory_space<vmem>>, %arg4: memref<1x8x128xf32, #tpu.memory_space<vmem>>, %arg5: memref<1x8x128xf32, #tpu.memory_space<vmem>>, %arg6: memref<8x240xf32, #tpu.memory_space<vmem>>, %arg7: memref<8x240xf32, #tpu.memory_space<vmem>>) attributes {dimension_semantics = [#tpu.dimension_semantics<parallel>, #tpu.dimension_semantics<arbitrary>], iteration_bounds = array<i64: 1, 1>, scalar_prefetch = 0 : i64, scratch_operands = 2 : i64, tpu.core_type = #tpu.core_type<tc>, window_params = [{transform_indices = @transform_0, window_bounds = array<i64: 8, 256>}, {transform_indices = @transform_1, window_bounds = array<i64: 8, 256>}, {transform_indices = @transform_2, window_bounds = array<i64: 1, 8, 128>}, {transform_indices = @transform_3, window_bounds = array<i64: 1, 8, 128>}]} {
    %c0_i32 = arith.constant 0 : i32
    %0 = arith.cmpi eq, %arg1, %c0_i32 : i32
    %1 = arith.extui %0 : i1 to i32
    %c0_i32_0 = arith.constant 0 : i32
    %2 = arith.cmpi ne, %1, %c0_i32_0 : i32
    scf.if %2 {
      %cst = arith.constant 0.000000e+00 : f32
      %22 = vector.broadcast %cst : f32 to vector<8x240xf32>
      %c0_14 = arith.constant 0 : index
      %c0_15 = arith.constant 0 : index
      %23 = vector.load %arg6[%c0_14, %c0_15] : memref<8x240xf32, #tpu.memory_space<vmem>>, vector<8x240xf32>
      tpu.vector_store %arg6[%c0_14, %c0_15], %22 {strides = array<i32>} : memref<8x240xf32, #tpu.memory_space<vmem>>, vector<8x240xf32>,
      %cst_16 = arith.constant 0.000000e+00 : f32
      %24 = vector.broadcast %cst_16 : f32 to vector<8x240xf32>
      %c0_17 = arith.constant 0 : index
      %c0_18 = arith.constant 0 : index
      %25 = vector.load %arg7[%c0_17, %c0_18] : memref<8x240xf32, #tpu.memory_space<vmem>>, vector<8x240xf32>
      tpu.vector_store %arg7[%c0_17, %c0_18], %24 {strides = array<i32>} : memref<8x240xf32, #tpu.memory_space<vmem>>, vector<8x240xf32>,
    } else {
    }
    %c0 = arith.constant 0 : index
    %c0_1 = arith.constant 0 : index
    %3 = vector.load %arg2[%c0, %c0_1] : memref<8x256xf32, #tpu.memory_space<vmem>>, vector<8x256xf32>
    %c0_2 = arith.constant 0 : index
    %c0_3 = arith.constant 0 : index
    %4 = vector.load %arg3[%c0_2, %c0_3] : memref<8x256xf32, #tpu.memory_space<vmem>>, vector<8x256xf32>
    %5 = vector.extract_strided_slice %3 {offsets = [0, 0], sizes = [8, 240], strides = [1, 1]} : vector<8x256xf32> to vector<8x240xf32>
    %6 = vector.extract_strided_slice %3 {offsets = [0, 16], sizes = [8, 240], strides = [1, 1]} : vector<8x256xf32> to vector<8x240xf32>
    %7 = arith.subf %5, %6 : vector<8x240xf32>
    %8 = math.absf %7 : vector<8x240xf32>
    %9 = vector.extract_strided_slice %4 {offsets = [0, 0], sizes = [8, 240], strides = [1, 1]} : vector<8x256xf32> to vector<8x240xf32>
    %10 = vector.extract_strided_slice %4 {offsets = [0, 16], sizes = [8, 240], strides = [1, 1]} : vector<8x256xf32> to vector<8x240xf32>
    %11 = arith.subf %9, %10 : vector<8x240xf32>
    %12 = math.absf %11 : vector<8x240xf32>
    %c0_4 = arith.constant 0 : index
    %c0_5 = arith.constant 0 : index
    %13 = vector.load %arg6[%c0_4, %c0_5] : memref<8x240xf32, #tpu.memory_space<vmem>>, vector<8x240xf32>
    %14 = arith.addf %13, %8 : vector<8x240xf32>
    %c0_6 = arith.constant 0 : index
    %c0_7 = arith.constant 0 : index
    %15 = vector.load %arg6[%c0_6, %c0_7] : memref<8x240xf32, #tpu.memory_space<vmem>>, vector<8x240xf32>
    tpu.vector_store %arg6[%c0_6, %c0_7], %14 {strides = array<i32>} : memref<8x240xf32, #tpu.memory_space<vmem>>, vector<8x240xf32>,
    %c0_8 = arith.constant 0 : index
    %c0_9 = arith.constant 0 : index
    %16 = vector.load %arg7[%c0_8, %c0_9] : memref<8x240xf32, #tpu.memory_space<vmem>>, vector<8x240xf32>
    %17 = arith.addf %16, %12 : vector<8x240xf32>
    %c0_10 = arith.constant 0 : index
    %c0_11 = arith.constant 0 : index
    %18 = vector.load %arg7[%c0_10, %c0_11] : memref<8x240xf32, #tpu.memory_space<vmem>>, vector<8x240xf32>
    tpu.vector_store %arg7[%c0_10, %c0_11], %17 {strides = array<i32>} : memref<8x240xf32, #tpu.memory_space<vmem>>, vector<8x240xf32>,
    %c0_i32_12 = arith.constant 0 : i32
    %19 = arith.cmpi eq, %arg1, %c0_i32_12 : i32
    %20 = arith.extui %19 : i1 to i32
    %c0_i32_13 = arith.constant 0 : i32
    %21 = arith.cmpi ne, %20, %c0_i32_13 : i32
    scf.if %21 {
      %c0_14 = arith.constant 0 : index
      %c0_15 = arith.constant 0 : index
      %22 = vector.load %arg6[%c0_14, %c0_15] : memref<8x240xf32, #tpu.memory_space<vmem>>, vector<8x240xf32>
      %23 = vector.shape_cast %22 : vector<8x240xf32> to vector<1x8x240xf32>
      %cst = arith.constant dense<0.000000e+00> : vector<1xf32>
      %24 = vector.multi_reduction <add>, %23, %cst [1, 2] : vector<1x8x240xf32> to vector<1xf32>
      %25 = vector.shape_cast %24 : vector<1xf32> to vector<1x1x1xf32>
      %26 = vector.extract %25[0, 0, 0] : f32 from vector<1x1x1xf32>
      %c0_16 = arith.constant 0 : index
      %c0_17 = arith.constant 0 : index
      %27 = vector.load %arg7[%c0_16, %c0_17] : memref<8x240xf32, #tpu.memory_space<vmem>>, vector<8x240xf32>
      %28 = vector.shape_cast %27 : vector<8x240xf32> to vector<1x8x240xf32>
      %cst_18 = arith.constant dense<0.000000e+00> : vector<1xf32>
      %29 = vector.multi_reduction <add>, %28, %cst_18 [1, 2] : vector<1x8x240xf32> to vector<1xf32>
      %30 = vector.shape_cast %29 : vector<1xf32> to vector<1x1x1xf32>
      %31 = vector.extract %30[0, 0, 0] : f32 from vector<1x1x1xf32>
      %cst_19 = arith.constant 0.000000e+00 : f32
      %32 = vector.broadcast %cst_19 : f32 to vector<1x8x128xf32>
      %33 = vector.broadcast %26 : f32 to vector<1x8x128xf32>
      %34 = arith.addf %32, %33 : vector<1x8x128xf32>
      %c0_20 = arith.constant 0 : index
      %c0_21 = arith.constant 0 : index
      %c0_22 = arith.constant 0 : index
      %35 = vector.load %arg4[%c0_20, %c0_21, %c0_22] : memref<1x8x128xf32, #tpu.memory_space<vmem>>, vector<1x8x128xf32>
      tpu.vector_store %arg4[%c0_20, %c0_21, %c0_22], %34 {strides = array<i32>} : memref<1x8x128xf32, #tpu.memory_space<vmem>>, vector<1x8x128xf32>,
      %cst_23 = arith.constant 0.000000e+00 : f32
      %36 = vector.broadcast %cst_23 : f32 to vector<1x8x128xf32>
      %37 = vector.broadcast %31 : f32 to vector<1x8x128xf32>
      %38 = arith.addf %36, %37 : vector<1x8x128xf32>
      %c0_24 = arith.constant 0 : index
      %c0_25 = arith.constant 0 : index
      %c0_26 = arith.constant 0 : index
      %39 = vector.load %arg5[%c0_24, %c0_25, %c0_26] : memref<1x8x128xf32, #tpu.memory_space<vmem>>, vector<1x8x128xf32>
      tpu.vector_store %arg5[%c0_24, %c0_25, %c0_26], %38 {strides = array<i32>} : memref<1x8x128xf32, #tpu.memory_space<vmem>>, vector<1x8x128xf32>,
    } else {
    }
    return
  }
  func.func @transform_0(%arg0: i32, %arg1: i32) -> (i32, i32) {
    %c1_i32 = arith.constant 1 : i32
    %0 = arith.muli %arg0, %c1_i32 : i32
    %1 = arith.addi %0, %arg1 : i32
    %c0_i32 = arith.constant 0 : i32
    %c0_i32_0 = arith.constant 0 : i32
    return %1, %c0_i32 : i32, i32
  }
  func.func @transform_1(%arg0: i32, %arg1: i32) -> (i32, i32) {
    %c1_i32 = arith.constant 1 : i32
    %0 = arith.muli %arg0, %c1_i32 : i32
    %1 = arith.addi %0, %arg1 : i32
    %c0_i32 = arith.constant 0 : i32
    %c0_i32_0 = arith.constant 0 : i32
    return %1, %c0_i32 : i32, i32
  }
  func.func @transform_2(%arg0: i32, %arg1: i32) -> (i32, i32, i32) {
    %c0_i32 = arith.constant 0 : i32
    %c0_i32_0 = arith.constant 0 : i32
    %c0_i32_1 = arith.constant 0 : i32
    return %arg0, %c0_i32, %c0_i32_0 : i32, i32, i32
  }
  func.func @transform_3(%arg0: i32, %arg1: i32) -> (i32, i32, i32) {
    %c0_i32 = arith.constant 0 : i32
    %c0_i32_0 = arith.constant 0 : i32
    %c0_i32_1 = arith.constant 0 : i32
    return %arg0, %c0_i32, %c0_i32_0 : i32, i32, i32
  }
}

</mosaic_0001>

<llo_original>
// kernel: tpu_custom_call.1
$region0: #{tpu_custom_call.1}
  #allocation0 [shape = 'u32[]', space=smem, size = 0x4, offset = 0x4, fixed_abs, tag = 'smem constant byte address 0x4 - core index']
  #allocation1 [shape = 'u32[144,128]{1,0:T(1,128)}', space=vmem, size = 0x12000, scoped, tag = 'internal scratch']
  #allocation2 [shape = 'f32[8,240]{1,0:T(8,128)}', space=vmem, size = 0x2000, scoped, tag = 'scratch operand']
  #allocation3 [shape = 'f32[8,240]{1,0:T(8,128)}', space=vmem, size = 0x2000, scoped, tag = 'scratch operand']
  %s0 = inlined_call_operand.hbm [shape: f32[8,256], index: 0, kind: input, shape index: {}]
  %s1 = inlined_call_operand.hbm [shape: f32[8,256], index: 1, kind: input, shape index: {}]
  %s2 = inlined_call_operand.hbm [shape: f32[1,8,128], index: 2, kind: output, shape index: {0}]
  %s3 = inlined_call_operand.hbm [shape: f32[1,8,128], index: 3, kind: output, shape index: {1}]
  %4 = xla_tuple %s2, %s3
  %s5 = sld [smem:[#allocation0]]
  $region42: #{tpu_custom_call.1} parent=0
    _
  %s7 = ssub.s32 1, %s5
  %s8 = scalar_select 0, %s7, %s5
  $region1: #{tpu_custom_call.1} parent=0
    #allocation4 [shape = 'u8[8192]{0}', space=vmem, size = 0x2000, scoped, tag = 'input window, operand 0, single buffered']
    #allocation5 [shape = 's32[1]{0}', space=sflag, size = 0x4, scoped, tag = 'scoped memory for tpu_custom_call.1']
    #allocation6 [shape = 's32[1]{0}', space=sflag, size = 0x4, scoped, tag = 'scoped memory for tpu_custom_call.1']
    #allocation7 [shape = 'u8[8192]{0}', space=vmem, size = 0x2000, scoped, tag = 'input window, operand 1, single buffered']
    #allocation8 [shape = 's32[1]{0}', space=sflag, size = 0x4, scoped, tag = 'scoped memory for tpu_custom_call.1']
    #allocation9 [shape = 'u8[4096]{0}', space=vmem, size = 0x1000, scoped, tag = 'output window, operand 0, single buffered']
    #allocation10 [shape = 'u8[4096]{0}', space=vmem, size = 0x1000, scoped, tag = 'output window, operand 1, single buffered']
    #allocation11 [shape = 's32[1]{0}', space=sflag, size = 0x4, scoped, tag = 'scoped memory for tpu_custom_call.1']
    %9 = vsyncpa [#allocation5], 0
    %10 = vsyncpa [#allocation8], 0
    %11 = vsyncpa [#allocation6], 0
    %12 = vsyncpa [#allocation11], 0
    // Predicated region
    $region2: #{tpu_custom_call.1} parent=1 // pred_check
      _
    $region3: #{tpu_custom_call.1} parent=1 // pred_check_branch
      %14 = sbr.rel (0) target = $region5
    $region4: #{tpu_custom_call.1} parent=1 // pred_region
      %s15 = sadd.s32 0, 0
      %s17 = ssub.s32 256, 256
      %18 = vsyncadd [#allocation5], %s17
      %s19 = smul.addr %s15, 2
      %s20 = smul.addr %s19, 128
      %s21 = scalar_lea.hbm %s0, %s20
      %s23 = sshll.u32 [#allocation4], 4
      %s24 = int_to_ptr.vmem [resolvable:$true] %s23
      %26 = dma.hbm_to_vmem [thread:$0]  %s21, 256, %s24, [#allocation5]
    $region5: #{tpu_custom_call.1} parent=1 // pred_fallthru
      _
    // Predicated region
    $region6: #{tpu_custom_call.1} parent=1 // pred_check
      _
    $region7: #{tpu_custom_call.1} parent=1 // pred_check_branch
      %28 = sbr.rel (0) target = $region9
    $region8: #{tpu_custom_call.1} parent=1 // pred_region
      %s29 = sadd.s32 0, 0
      %s31 = ssub.s32 256, 256
      %32 = vsyncadd [#allocation8], %s31
      %s33 = smul.addr %s29, 2
      %s34 = smul.addr %s33, 128
      %s35 = scalar_lea.hbm %s1, %s34
      %s37 = sshll.u32 [#allocation7], 4
      %s38 = int_to_ptr.vmem [resolvable:$true] %s37
      %40 = dma.hbm_to_vmem [thread:$0]  %s35, 256, %s38, [#allocation8]
    $region9: #{tpu_custom_call.1} parent=1 // pred_fallthru
      _
    // Predicated region
    $region10: #{tpu_custom_call.1} parent=1 // pred_check
      _
    $region11: #{tpu_custom_call.1} parent=1 // pred_check_branch
      %42 = sbr.rel (0) target = $region13
    $region12: #{tpu_custom_call.1} parent=1 // pred_region
      %43 = dma.done [#allocation5], 256
    $region13: #{tpu_custom_call.1} parent=1 // pred_fallthru
      _
    // Predicated region
    $region14: #{tpu_custom_call.1} parent=1 // pred_check
      _
    $region15: #{tpu_custom_call.1} parent=1 // pred_check_branch
      %45 = sbr.rel (0) target = $region17
    $region16: #{tpu_custom_call.1} parent=1 // pred_region
      %46 = dma.done [#allocation8], 256
    $region17: #{tpu_custom_call.1} parent=1 // pred_fallthru
      _
    %s47 = sadd.s32 0, 0
    %s48 = sadd.s32 0, 0
    %p49 = scmp.eq.s32.totalorder 0, 0
    // Predicated region
    $region18: #{tpu_custom_call.1} parent=1 // pred_check
      %p50 = pneg %p49
    $region19: #{tpu_custom_call.1} parent=1 // pred_check_branch
      %52 = sbr.rel (%p50) target = $region21
    $region20: #{tpu_custom_call.1} parent=1 // pred_region
      %53 = vst [vmem:[#allocation2] sm:$0xff] 0.0
      %vm54 = vcmask 916480
      %55 = vst.msk [vmem:[#allocation2 + $0x8] sm:$0xff] %vm54, 0.0
      %56 = vst [vmem:[#allocation3] sm:$0xff] 0.0
      %57 = vst.msk [vmem:[#allocation3 + $0x8] sm:$0xff] %vm54, 0.0
    $region21: #{tpu_custom_call.1} parent=1 // pred_fallthru
      _
    %v58 = vld [vmem:[#allocation4] sm:$0xff]
    %v59 = vld [vmem:[#allocation4 + $0x8] sm:$0xff]
    %v60 = vld [vmem:[#allocation7] sm:$0xff]
    %v61 = vld [vmem:[#allocation7 + $0x8] sm:$0xff]
    %64 = vrot.lane.b32.xlu0 %v58, 112
    %v65 = vpop.permute.xlu0 %64
    %66 = vrot.lane.b32.xlu0 %v59, 112
    %v67 = vpop.permute.xlu0 %66
    %vm68 = vcmask 916480
    %v69 = vsel %vm68, %v65, %v67
    %v72 = vsub.f32 %v58, %v69
    %v73 = vsub.f32 %v59, %v67
    %v74 = vand.u32 2147483647, %v72
    %v75 = vand.u32 2147483647, %v73
    %78 = vrot.lane.b32.xlu0 %v60, 112
    %v79 = vpop.permute.xlu0 %78
    %80 = vrot.lane.b32.xlu0 %v61, 112
    %v81 = vpop.permute.xlu0 %80
    %v82 = vsel %vm68, %v79, %v81
    %v85 = vsub.f32 %v60, %v82
    %v86 = vsub.f32 %v61, %v81
    %v87 = vand.u32 2147483647, %v85
    %v88 = vand.u32 2147483647, %v86
    %v89 = vld [vmem:[#allocation2] sm:$0xff]
    %v90 = vld [vmem:[#allocation2 + $0x8] sm:$0xff]
    %v91 = vadd.f32 %v89, %v74
    %v92 = vadd.f32 %v90, %v75
    %93 = vst [vmem:[#allocation2] sm:$0xff] %v91
    %94 = vst.msk [vmem:[#allocation2 + $0x8] sm:$0xff] %vm68, %v92
    %v95 = vld [vmem:[#allocation3] sm:$0xff]
    %v96 = vld [vmem:[#allocation3 + $0x8] sm:$0xff]
    %v97 = vadd.f32 %v95, %v87
    %v98 = vadd.f32 %v96, %v88
    %99 = vst [vmem:[#allocation3] sm:$0xff] %v97
    %100 = vst.msk [vmem:[#allocation3 + $0x8] sm:$0xff] %vm68, %v98
    // Predicated region
    $region22: #{tpu_custom_call.1} parent=1 // pred_check
      %p101 = pneg %p49
    $region23: #{tpu_custom_call.1} parent=1 // pred_check_branch
      %103 = sbr.rel (%p101) target = $region25
    $region24: #{tpu_custom_call.1} parent=1 // pred_region
      %v104 = vld [vmem:[#allocation2] sm:$0xff]
      %v105 = vld [vmem:[#allocation2 + $0x8] sm:$0xff]
      %v106 = vsel %vm68, %v105, 0.0
      %v107 = vadd.f32 %v104, %v106
      %108 = vadd.xlane.f32.xlu0 %v107
      %v109 = vpop.xlane.xlu0 %108
      %v110 = vrot.slane %v109, 4
      %v111 = vadd.f32 %v109, %v110
      %v112 = vrot.slane %v111, 2
      %v113 = vadd.f32 %v111, %v112
      %v114 = vrot.slane %v113, 1
      %v115 = vadd.f32 %v113, %v114
      %s116 = vtos %v115
      %v117 = vld [vmem:[#allocation3] sm:$0xff]
      %v118 = vld [vmem:[#allocation3 + $0x8] sm:$0xff]
      %v119 = vsel %vm68, %v118, 0.0
      %v120 = vadd.f32 %v117, %v119
      %121 = vadd.xlane.f32.xlu0 %v120
      %v122 = vpop.xlane.xlu0 %121
      %v123 = vrot.slane %v122, 4
      %v124 = vadd.f32 %v122, %v123
      %v125 = vrot.slane %v124, 2
      %v126 = vadd.f32 %v124, %v125
      %v127 = vrot.slane %v126, 1
      %v128 = vadd.f32 %v126, %v127
      %s129 = vtos %v128
      %v130 = vstv %s116
      %v131 = vadd.f32 %v130, 0.0
      %132 = vst [vmem:[#allocation9] sm:$0xff] %v131
      %v133 = vstv %s129
      %v134 = vadd.f32 %v133, 0.0
      %135 = vst [vmem:[#allocation10] sm:$0xff] %v134
    $region25: #{tpu_custom_call.1} parent=1 // pred_fallthru
      _
    // Predicated region
    $region26: #{tpu_custom_call.1} parent=1 // pred_check
      _
    $region27: #{tpu_custom_call.1} parent=1 // pred_check_branch
      %137 = sbr.rel (0) target = $region29
    $region28: #{tpu_custom_call.1} parent=1 // pred_region
      %s139 = ssub.s32 128, 128
      %140 = vsyncadd [#allocation6], %s139
      %s142 = sshll.u32 [#allocation9], 4
      %s143 = int_to_ptr.vmem [resolvable:$true] %s142
      %145 = dma.vmem_to_hbm [thread:$0]  %s143, 128, %s2, [#allocation6]
    $region29: #{tpu_custom_call.1} parent=1 // pred_fallthru
      _
    // Predicated region
    $region30: #{tpu_custom_call.1} parent=1 // pred_check
      _
    $region31: #{tpu_custom_call.1} parent=1 // pred_check_branch
      %147 = sbr.rel (0) target = $region33
    $region32: #{tpu_custom_call.1} parent=1 // pred_region
      %s149 = ssub.s32 128, 128
      %150 = vsyncadd [#allocation11], %s149
      %s152 = sshll.u32 [#allocation10], 4
      %s153 = int_to_ptr.vmem [resolvable:$true] %s152
      %155 = dma.vmem_to_hbm [thread:$0]  %s153, 128, %s3, [#allocation11]
    $region33: #{tpu_custom_call.1} parent=1 // pred_fallthru
      _
    // Predicated region
    $region34: #{tpu_custom_call.1} parent=1 // pred_check
      _
    $region35: #{tpu_custom_call.1} parent=1 // pred_check_branch
      %157 = sbr.rel (0) target = $region37
    $region36: #{tpu_custom_call.1} parent=1 // pred_region
      %158 = dma.done [#allocation6], 128
    $region37: #{tpu_custom_call.1} parent=1 // pred_fallthru
      _
    // Predicated region
    $region38: #{tpu_custom_call.1} parent=1 // pred_check
      _
    $region39: #{tpu_custom_call.1} parent=1 // pred_check_branch
      %160 = sbr.rel (0) target = $region41
    $region40: #{tpu_custom_call.1} parent=1 // pred_region
      %161 = dma.done [#allocation11], 128
    $region41: #{tpu_custom_call.1} parent=1 // pred_fallthru
      _
    %162 = vsyncpa [#allocation5], 1
    %163 = vsyncpa [#allocation8], 1
    %164 = vsyncpa [#allocation6], 1
    %165 = vsyncpa [#allocation11], 1

</llo_original>
